<compile_context>
chip_gen: v7x
topology: tpu7x:2x2x1
jax: 0.10.0
libtpu: 0.0.40
codegen_flags: <defaults>
</compile_context>

<pallas_src>
import functools

import jax
import jax.numpy as jnp
from jax.experimental import pallas as pl
from jax.experimental.pallas import tpu as pltpu

_NUM_CORE_SPLITS = 2                      # leading "parallel" stats axis (both v7x TCs busy)
_VMEM_LIMIT_BYTES = 48 * 1024 * 1024      # explicit scoped-VMEM limit (fits v5e/v6e/v7x)
_VMEM_TARGET_BYTES = 28 * 1024 * 1024     # tile sizing target (leaves headroom under the limit)


# ----------------------------- kernel 1: partial statistics -----------------------------
def _stats_kernel(x_ref, tl_ref, part_ref, *,
                  num_label, num_group, split, n, tile_rows, tiles_per_core):
    """Accumulate a (G+1, F+2) partial-moment block per core split.

    Row g <  G : [ sum_x over train rows of group g | count | sum ||x||^2 ]
    Row g == G : the same three moments over the test rows.
    """
    c = pl.program_id(0)
    i = pl.program_id(1)

    @pl.when(i == 0)
    def _init():
        part_ref[...] = jnp.zeros_like(part_ref)

    x = x_ref[...]                                    # (TN, F) f32
    tl = tl_ref[...]                                  # (TN, 2) i32
    t = tl[:, 0:1]
    l = tl[:, 1:2]
    tn = x.shape[0]

    # Global row index of each row in this tile.  The index map is clamped for
    # out-of-range tiles, the mask here is NOT, so OOB tiles / ragged tails contribute 0.
    row0 = (c * tiles_per_core + i) * tile_rows
    rows = row0 + jax.lax.broadcasted_iota(jnp.int32, (tn, 1), 0)
    valid = rows < n

    x = jnp.where(valid, x, 0.0)                      # keep garbage/NaN rows out of the matmul
    row_sq = jnp.sum(x * x, axis=1, keepdims=True)    # (TN, 1)

    train = jnp.logical_and(t < split, valid)         # (TN, 1)
    test = jnp.logical_and(t >= split, valid)         # (TN, 1)

    gid = t * num_label + l                           # (TN, 1), in [0, G) for in-range data
    lane = jax.lax.broadcasted_iota(jnp.int32, (tn, num_group + 1), 1)
    m = jnp.where(jnp.logical_and(lane == gid, train), 1.0, 0.0)          # train one-hot
    m = jnp.where(jnp.logical_and(lane == num_group, test), 1.0, m)       # extra 'test' column

    rhs = jnp.concatenate([x, jnp.ones((tn, 1), jnp.float32), row_sq], axis=1)  # (TN, F+2)

    # Single fused MXU contraction: m^T @ rhs  ->  (G+1, F+2), accumulated in the output ref.
    part_ref[...] += jax.lax.dot_general(m, rhs, (((0,), (0,)), ((), ())),
                                         preferred_element_type=jnp.float32)


# ----------------------------- kernel 2: combine + finalize -----------------------------
def _finalize_kernel(part_ref, table_ref, *, num_time, num_label, f):
    num_group = num_time * num_label
    total = jnp.sum(part_ref[...], axis=0)            # (G+1, F+2)

    gsum = total[:num_group, :f]                      # (G, F)
    gcnt = total[:num_group, f:f + 1]                 # (G, 1)
    gsq = total[:num_group, f + 1:f + 2]              # (G, 1)
    tsum = total[num_group:, :f]                      # (1, F)
    tcnt = total[num_group:, f:f + 1]                 # (1, 1)
    tsq = total[num_group:, f + 1:f + 2]              # (1, 1)

    mean = gsum / jnp.maximum(gcnt, 1.0)              # group means (0 for empty groups)

    # P[t, g] = 1 iff group g belongs to time bin t.
    g_col = jax.lax.broadcasted_iota(jnp.int32, (num_time, num_group), 1)
    t_row = jax.lax.broadcasted_iota(jnp.int32, (num_time, num_group), 0)
    p = jnp.where(jnp.logical_and(g_col >= t_row * num_label,
                                  g_col < (t_row + 1) * num_label), 1.0, 0.0)

    contract0 = (((0,), (0,)), ((), ()))              # contract leading dims (== P^T @ rhs)

    time_sum = jnp.dot(p, gsum, preferred_element_type=jnp.float32)        # (T, F)
    time_cnt = jnp.dot(p, gcnt, preferred_element_type=jnp.float32)        # (T, 1)
    time_mean = time_sum / jnp.maximum(time_cnt, 1.0)
    time_mean_g = jax.lax.dot_general(p, time_mean, contract0,
                                      preferred_element_type=jnp.float32)  # (G, F)

    between = jnp.sum((mean - time_mean_g) ** 2, axis=1, keepdims=True)    # (G, 1)
    msq = jnp.dot(p, gcnt * between, preferred_element_type=jnp.float32)   # (T, 1)
    # sum_{u in g} ||x_u - mean_g||^2 == sum ||x_u||^2 - cnt * ||mean_g||^2  (exact for cnt>=1)
    within = jnp.maximum(gsq - gcnt * jnp.sum(mean * mean, axis=1, keepdims=True), 0.0)
    rsq = jnp.dot(p, within, preferred_element_type=jnp.float32)           # (T, 1)

    denom = jnp.maximum(time_cnt - 1.0, 1.0)
    msq = msq / denom
    rsq = rsq / denom

    test_mean = tsum / jnp.maximum(tcnt, 1.0)
    test_var = jnp.maximum(
        tsq - tcnt * jnp.sum(test_mean * test_mean, axis=1, keepdims=True), 0.0
    ) / jnp.maximum(tcnt - 1.0, 1.0)                                        # (1, 1)

    alpha_sq = (test_var - msq) / jnp.maximum(rsq, 1e-6)                    # (T, 1)
    alpha_t = jnp.where(alpha_sq > 0.0, jnp.sqrt(jnp.maximum(alpha_sq, 0.0)), 0.0)
    # alpha is only ever gathered by train rows (t < split); entries for t >= split are dead.

    alpha_g = jax.lax.dot_general(p, alpha_t, contract0,
                                  preferred_element_type=jnp.float32)       # (G, 1)
    # Fused gather table: [ (1 - alpha_t) * group_mean | alpha_t ]
    table_ref[...] = jnp.concatenate([(1.0 - alpha_g) * mean, alpha_g], axis=1)


# ----------------------------- kernel 3: apply -----------------------------
def _apply_kernel(x_ref, tl_ref, table_ref, out_ref, *, num_label, num_group, split, f):
    x = x_ref[...]                                    # (TN, F)
    tl = tl_ref[...]                                  # (TN, 2)
    t = tl[:, 0:1]
    l = tl[:, 1:2]
    tn = x.shape[0]

    train = t < split                                 # (TN, 1)
    gid = t * num_label + l
    lane = jax.lax.broadcasted_iota(jnp.int32, (tn, num_group), 1)
    m = jnp.where(jnp.logical_and(lane == gid, train), 1.0, 0.0)            # (TN, G)

    gathered = jnp.dot(m, table_ref[...], preferred_element_type=jnp.float32)  # (TN, F+1)
    pre_mean = gathered[:, :f]                        # (1 - alpha_t) * group_mean
    alpha_row = gathered[:, f:f + 1]                  # alpha_t

    blended = alpha_row * x + pre_mean
    out_ref[...] = jnp.where(train, blended, x).astype(out_ref.dtype)


# ----------------------------- wrapper -----------------------------
def _pick_tile_rows(requested, n, f, num_group):
    n8 = ((n + 7) // 8) * 8
    tr = max(8, (min(int(requested), n8) // 8) * 8)
    g1, f2 = num_group + 1, f + 2

    def vmem_bytes(t):
        stream = 2 * (t * f + 2 * t) + 2 * t * f                  # double-buffered x/tl + out
        resident = 2 * _NUM_CORE_SPLITS * g1 * f2 + 2 * num_group * (f + 1)
        temps = t * g1 + t * f2 + t * (f + 1) + g1 * f2           # one-hot / rhs / gathered
        return 4 * (stream + resident + temps)

    while tr > 8 and vmem_bytes(tr) > _VMEM_TARGET_BYTES:
        tr = max(8, ((tr // 2) // 8) * 8)
    return tr


def jj_norm_forward(x, times, labels, *, num_time, num_label, split, tile_rows=1024):
    x = jnp.asarray(x, jnp.float32)
    n, f = x.shape
    num_group = num_time * num_label
    g1, f2 = num_group + 1, f + 2

    # One small int32 side-channel per tile instead of two 1-wide ones.
    tl = jnp.stack([jnp.asarray(times, jnp.int32).reshape(n),
                    jnp.asarray(labels, jnp.int32).reshape(n)], axis=1)     # (n, 2)

    tile_rows = _pick_tile_rows(tile_rows, n, f, num_group)
    num_tiles = int(pl.cdiv(n, tile_rows))
    tiles_per_core = int(pl.cdiv(num_tiles, _NUM_CORE_SPLITS))

    def row_map(c, i):
        # Clamp OOB tiles to the last real block; the in-kernel validity mask zeroes them.
        return (jnp.minimum(c * tiles_per_core + i, num_tiles - 1), 0)

    itemsize = 4
    stats_cost = pl.CostEstimate(
        flops=2 * n * g1 * f2 + 6 * n * f,
        transcendentals=0,
        bytes_accessed=(n * f + 2 * n + _NUM_CORE_SPLITS * g1 * f2) * itemsize)

    # Pass 1: per-core partial (G+1, F+2) moment matrices.
    partials = pl.pallas_call(
        functools.partial(_stats_kernel, num_label=num_label, num_group=num_group,
                          split=split, n=n, tile_rows=tile_rows,
                          tiles_per_core=tiles_per_core),
        out_shape=jax.ShapeDtypeStruct((_NUM_CORE_SPLITS, g1, f2), jnp.float32),
        grid_spec=pltpu.PrefetchScalarGridSpec(
            num_scalar_prefetch=0,
            grid=(_NUM_CORE_SPLITS, tiles_per_core),
            in_specs=[pl.BlockSpec((tile_rows, f), row_map),
                      pl.BlockSpec((tile_rows, 2), row_map)],
            out_specs=pl.BlockSpec((None, g1, f2), lambda c, i: (c, 0, 0))),
        compiler_params=pltpu.CompilerParams(
            dimension_semantics=("parallel", "arbitrary"),
            vmem_limit_bytes=_VMEM_LIMIT_BYTES),
        cost_estimate=stats_cost,
    )(x, tl)

    # Pass 2: tiny combine + finalize -> fused (G, F+1) table [(1-alpha)*mean | alpha].
    table = pl.pallas_call(
        functools.partial(_finalize_kernel, num_time=num_time, num_label=num_label, f=f),
        out_shape=jax.ShapeDtypeStruct((num_group, f + 1), jnp.float32),
        grid_spec=pltpu.PrefetchScalarGridSpec(
            num_scalar_prefetch=0,
            grid=(1,),
            in_specs=[pl.BlockSpec((_NUM_CORE_SPLITS, g1, f2), lambda i: (0, 0, 0))],
            out_specs=pl.BlockSpec((num_group, f + 1), lambda i: (0, 0))),
        compiler_params=pltpu.CompilerParams(vmem_limit_bytes=_VMEM_LIMIT_BYTES),
    )(partials)

    apply_cost = pl.CostEstimate(
        flops=2 * n * num_group * (f + 1) + 4 * n * f,
        transcendentals=0,
        bytes_accessed=(2 * n * f + 2 * n + num_group * (f + 1)) * itemsize)

    # Pass 3: row-parallel gather + blend, written directly into the (N, F) output.
    out = pl.pallas_call(
        functools.partial(_apply_kernel, num_label=num_label, num_group=num_group,
                          split=split, f=f),
        out_shape=jax.ShapeDtypeStruct((n, f), jnp.float32),
        grid_spec=pltpu.PrefetchScalarGridSpec(
            num_scalar_prefetch=0,
            grid=(num_tiles,),
            in_specs=[pl.BlockSpec((tile_rows, f), lambda i: (i, 0)),
                      pl.BlockSpec((tile_rows, 2), lambda i: (i, 0)),
                      pl.BlockSpec((num_group, f + 1), lambda i: (0, 0))],
            out_specs=pl.BlockSpec((tile_rows, f), lambda i: (i, 0))),
        compiler_params=pltpu.CompilerParams(
            dimension_semantics=("parallel",),
            vmem_limit_bytes=_VMEM_LIMIT_BYTES),
        cost_estimate=apply_cost,
    )(x, tl, table)

    return out


# ----------------------------- plain-JAX reference -----------------------------
def reference_jj_norm(x, times, labels, num_time, num_label, split):
    x = jnp.asarray(x, jnp.float32)
    n, f = x.shape
    times = jnp.asarray(times, jnp.int32)
    labels = jnp.asarray(labels, jnp.int32)
    train = times < split
    test = ~train
    train_f = train.astype(jnp.float32)
    test_f = test.astype(jnp.float32)

    num_group = num_time * num_label
    gid = times * num_label + labels
    onehot_g = ((jnp.arange(num_group)[None, :] == gid[:, None]) & train[:, None]
                ).astype(jnp.float32)
    gsum = onehot_g.T @ x
    gcnt = onehot_g.sum(axis=0)
    gmean = gsum / jnp.maximum(gcnt, 1.0)[:, None]

    time_sum = gsum.reshape(num_time, num_label, f).sum(axis=1)
    time_cnt = gcnt.reshape(num_time, num_label).sum(axis=1)
    time_mean = time_sum / jnp.maximum(time_cnt, 1.0)[:, None]

    tcnt = test_f.sum()
    test_mean = (test_f[:, None] * x).sum(axis=0) / jnp.maximum(tcnt, 1.0)
    test_var = (test_f * jnp.sum((x - test_mean[None, :]) ** 2, axis=1)).sum() \
        / jnp.maximum(tcnt - 1.0, 1.0)

    gathered = onehot_g @ gmean
    time_mean_rows = time_mean[times]
    onehot_t = (jnp.arange(num_time)[None, :] == times[:, None]).astype(jnp.float32)
    msq = (onehot_t * (train_f * jnp.sum((gathered - time_mean_rows) ** 2, axis=1))[:, None]
           ).sum(axis=0)
    rsq = (onehot_t * (train_f * jnp.sum((x - gathered) ** 2, axis=1))[:, None]).sum(axis=0)
    denom = jnp.maximum(time_cnt - 1.0, 1.0)
    msq = msq / denom
    rsq = rsq / denom

    alpha_sq = (test_var - msq) / jnp.maximum(rsq, 1e-6)
    alpha = jnp.where(alpha_sq > 0.0, jnp.sqrt(jnp.maximum(alpha_sq, 0.0)), 0.0)
    alpha_rows = alpha[times][:, None]
    return jnp.where(train[:, None], alpha_rows * x + (1.0 - alpha_rows) * gathered, x)


if __name__ == "__main__":
    # Small shapes consistent with the module: N samples, F features, T time bins, L labels.
    # N=200 with tile_rows=64 exercises multi-tile streaming, the 2-way stats core split and
    # the ragged (unpadded) last tile.
    N, F = 200, 16
    num_time, num_label, split = 8, 4, 5

    key = jax.random.PRNGKey(0)
    kx, kt, kl = jax.random.split(key, 3)
    x = jax.random.normal(kx, (N, F), dtype=jnp.float32)
    times = jax.random.randint(kt, (N,), 0, num_time, dtype=jnp.int32)
    labels = jax.random.randint(kl, (N,), 0, num_label, dtype=jnp.int32)

    out = jj_norm_forward(x, times, labels, num_time=num_time, num_label=num_label,
                          split=split, tile_rows=64)
    out = jax.block_until_ready(out)

    ref = reference_jj_norm(x, times, labels, num_time, num_label, split)
    assert out.shape == (N, F)
    assert jnp.allclose(out, ref, atol=1e-4, rtol=1e-4), float(jnp.max(jnp.abs(out - ref)))

    print("KERNEL_OK")
</pallas_src>

<mosaic_0001>
module attributes {stable_mosaic.version = 11 : i64} {
  func.func @_stats_kernel(%arg0: i32, %arg1: i32, %arg2: memref<64x16xf32, #tpu.memory_space<vmem>>, %arg3: memref<64x2xi32, #tpu.memory_space<vmem>>, %arg4: memref<1x33x18xf32, #tpu.memory_space<vmem>>) attributes {dimension_semantics = [#tpu.dimension_semantics<parallel>, #tpu.dimension_semantics<arbitrary>], iteration_bounds = array<i64: 2, 2>, scalar_prefetch = 0 : i64, scratch_operands = 0 : i64, tpu.core_type = #tpu.core_type<tc>, window_params = [{transform_indices = @transform_0, window_bounds = array<i64: 64, 16>}, {transform_indices = @transform_1, window_bounds = array<i64: 64, 2>}, {transform_indices = @transform_2, window_bounds = array<i64: 1, 33, 18>}]} {
    %c0_i32 = arith.constant 0 : i32
    %0 = arith.cmpi eq, %arg1, %c0_i32 : i32
    %1 = arith.extui %0 : i1 to i32
    %c0_i32_0 = arith.constant 0 : i32
    %2 = arith.cmpi ne, %1, %c0_i32_0 : i32
    scf.if %2 {
      %cst_17 = arith.constant 0.000000e+00 : f32
      %54 = vector.broadcast %cst_17 : f32 to vector<33x18xf32>
      %c0_18 = arith.constant 0 : index
      %c0_19 = arith.constant 0 : index
      %c0_20 = arith.constant 0 : index
      %55 = vector.load %arg4[%c0_18, %c0_19, %c0_20] : memref<1x33x18xf32, #tpu.memory_space<vmem>>, vector<1x33x18xf32>
      %56 = vector.shape_cast %55 : vector<1x33x18xf32> to vector<33x18xf32>
      %57 = vector.shape_cast %54 : vector<33x18xf32> to vector<1x33x18xf32>
      tpu.vector_store %arg4[%c0_18, %c0_19, %c0_20], %57 {strides = array<i32>} : memref<1x33x18xf32, #tpu.memory_space<vmem>>, vector<1x33x18xf32>,
    } else {
    }
    %c0 = arith.constant 0 : index
    %c0_1 = arith.constant 0 : index
    %3 = vector.load %arg2[%c0, %c0_1] : memref<64x16xf32, #tpu.memory_space<vmem>>, vector<64x16xf32>
    %c0_2 = arith.constant 0 : index
    %c0_3 = arith.constant 0 : index
    %4 = vector.load %arg3[%c0_2, %c0_3] : memref<64x2xi32, #tpu.memory_space<vmem>>, vector<64x2xi32>
    %5 = vector.extract_strided_slice %4 {offsets = [0, 0], sizes = [64, 1], strides = [1, 1]} : vector<64x2xi32> to vector<64x1xi32>
    %6 = vector.extract_strided_slice %4 {offsets = [0, 1], sizes = [64, 1], strides = [1, 1]} : vector<64x2xi32> to vector<64x1xi32>
    %c2_i32 = arith.constant 2 : i32
    %7 = arith.muli %arg0, %c2_i32 : i32
    %8 = arith.addi %7, %arg1 : i32
    %c64_i32 = arith.constant 64 : i32
    %9 = arith.muli %8, %c64_i32 : i32
    %10 = tpu.iota {dimensions = array<i32: 0>} : vector<64x1xi32>
    %11 = vector.broadcast %9 : i32 to vector<64x1xi32>
    %12 = arith.addi %11, %10 : vector<64x1xi32>
    %c200_i32 = arith.constant 200 : i32
    %13 = vector.broadcast %c200_i32 : i32 to vector<64x1xi32>
    %14 = arith.cmpi slt, %12, %13 : vector<64x1xi32>
    %cst = arith.constant 0.000000e+00 : f32
    %15 = vector.shape_cast %14 : vector<64x1xi1> to vector<64x1xi1>
    %16 = vector.broadcast %15 : vector<64x1xi1> to vector<64x16xi1>
    %17 = vector.broadcast %cst : f32 to vector<64x16xf32>
    %18 = arith.select %16, %3, %17 : vector<64x16xi1>, vector<64x16xf32>
    %19 = arith.mulf %18, %18 : vector<64x16xf32>
    %cst_4 = arith.constant dense<0.000000e+00> : vector<64xf32>
    %20 = vector.multi_reduction <add>, %19, %cst_4 [1] : vector<64x16xf32> to vector<64xf32>
    %21 = vector.shape_cast %20 : vector<64xf32> to vector<64x1xf32>
    %c5_i32 = arith.constant 5 : i32
    %22 = vector.broadcast %c5_i32 : i32 to vector<64x1xi32>
    %23 = arith.cmpi slt, %5, %22 : vector<64x1xi32>
    %24 = arith.andi %23, %14 : vector<64x1xi1>
    %c5_i32_5 = arith.constant 5 : i32
    %25 = vector.broadcast %c5_i32_5 : i32 to vector<64x1xi32>
    %26 = arith.cmpi sge, %5, %25 : vector<64x1xi32>
    %27 = arith.andi %26, %14 : vector<64x1xi1>
    %c4_i32 = arith.constant 4 : i32
    %28 = vector.broadcast %c4_i32 : i32 to vector<64x1xi32>
    %29 = arith.muli %5, %28 : vector<64x1xi32>
    %30 = arith.addi %29, %6 : vector<64x1xi32>
    %31 = tpu.iota {dimensions = array<i32: 1>} : vector<64x33xi32>
    %32 = vector.broadcast %30 : vector<64x1xi32> to vector<64x33xi32>
    %33 = arith.cmpi eq, %31, %32 : vector<64x33xi32>
    %34 = vector.broadcast %24 : vector<64x1xi1> to vector<64x33xi1>
    %35 = arith.andi %33, %34 : vector<64x33xi1>
    %cst_6 = arith.constant 1.000000e+00 : f32
    %cst_7 = arith.constant 0.000000e+00 : f32
    %36 = vector.broadcast %cst_6 : f32 to vector<64x33xf32>
    %37 = vector.broadcast %cst_7 : f32 to vector<64x33xf32>
    %38 = arith.select %35, %36, %37 : vector<64x33xi1>, vector<64x33xf32>
    %c32_i32 = arith.constant 32 : i32
    %39 = vector.broadcast %c32_i32 : i32 to vector<64x33xi32>
    %40 = arith.cmpi eq, %31, %39 : vector<64x33xi32>
    %41 = vector.broadcast %27 : vector<64x1xi1> to vector<64x33xi1>
    %42 = arith.andi %40, %41 : vector<64x33xi1>
    %cst_8 = arith.constant 1.000000e+00 : f32
    %43 = vector.broadcast %cst_8 : f32 to vector<64x33xf32>
    %44 = arith.select %42, %43, %38 : vector<64x33xi1>, vector<64x33xf32>
    %cst_9 = arith.constant 1.000000e+00 : f32
    %45 = vector.broadcast %cst_9 : f32 to vector<64x1xf32>
    %46 = tpu.concatenate %18, %45, %21 in 1 : vector<64x16xf32>, vector<64x1xf32>, vector<64x1xf32> -> vector<64x18xf32>
    %c0_10 = arith.constant 0 : index
    %c0_11 = arith.constant 0 : index
    %c0_12 = arith.constant 0 : index
    %47 = vector.load %arg4[%c0_10, %c0_11, %c0_12] : memref<1x33x18xf32, #tpu.memory_space<vmem>>, vector<1x33x18xf32>
    %48 = vector.shape_cast %47 : vector<1x33x18xf32> to vector<33x18xf32>
    %cst_13 = arith.constant dense<0.000000e+00> : vector<33x18xf32>
    %49 = tpu.matmul %44, %46, %cst_13 {dimension_numbers = #tpu.dot_dimension_numbers<[0], [0], [1], [1], [0, 1, 1, 1], [], []>} : vector<64x33xf32>, vector<64x18xf32>, vector<33x18xf32> -> vector<33x18xf32>
    %50 = arith.addf %48, %49 : vector<33x18xf32>
    %c0_14 = arith.constant 0 : index
    %c0_15 = arith.constant 0 : index
    %c0_16 = arith.constant 0 : index
    %51 = vector.load %arg4[%c0_14, %c0_15, %c0_16] : memref<1x33x18xf32, #tpu.memory_space<vmem>>, vector<1x33x18xf32>
    %52 = vector.shape_cast %51 : vector<1x33x18xf32> to vector<33x18xf32>
    %53 = vector.shape_cast %50 : vector<33x18xf32> to vector<1x33x18xf32>
    tpu.vector_store %arg4[%c0_14, %c0_15, %c0_16], %53 {strides = array<i32>} : memref<1x33x18xf32, #tpu.memory_space<vmem>>, vector<1x33x18xf32>,
    return
  }
  func.func @transform_0(%arg0: i32, %arg1: i32) -> (i32, i32) {
    %c2_i32 = arith.constant 2 : i32
    %0 = arith.muli %arg0, %c2_i32 : i32
    %1 = arith.addi %0, %arg1 : i32
    %c3_i32 = arith.constant 3 : i32
    %2 = arith.minsi %1, %c3_i32 : i32
    %c0_i32 = arith.constant 0 : i32
    %c0_i32_0 = arith.constant 0 : i32
    return %2, %c0_i32 : i32, i32
  }
  func.func @transform_1(%arg0: i32, %arg1: i32) -> (i32, i32) {
    %c2_i32 = arith.constant 2 : i32
    %0 = arith.muli %arg0, %c2_i32 : i32
    %1 = arith.addi %0, %arg1 : i32
    %c3_i32 = arith.constant 3 : i32
    %2 = arith.minsi %1, %c3_i32 : i32
    %c0_i32 = arith.constant 0 : i32
    %c0_i32_0 = arith.constant 0 : i32
    return %2, %c0_i32 : i32, i32
  }
  func.func @transform_2(%arg0: i32, %arg1: i32) -> (i32, i32, i32) {
    %c0_i32 = arith.constant 0 : i32
    %c0_i32_0 = arith.constant 0 : i32
    %c0_i32_1 = arith.constant 0 : i32
    return %arg0, %c0_i32, %c0_i32_0 : i32, i32, i32
  }
}

</mosaic_0001>

<llo_original>
// kernel: tpu_custom_call.1
$region0: #{tpu_custom_call.1}
  #allocation0 [shape = 'u32[]', space=smem, size = 0x4, offset = 0x4, fixed_abs, tag = 'smem constant byte address 0x4 - core index']
  #allocation1 [shape = 'u32[144,128]{1,0:T(1,128)}', space=vmem, size = 0x12000, scoped, tag = 'internal scratch']
  %s0 = inlined_call_operand.vmem [shape: f32[200,16], index: 0, kind: input, shape index: {}]
  %s1 = inlined_call_operand.vmem [shape: s32[200,2], index: 1, kind: input, shape index: {}]
  %s2 = inlined_call_operand.vmem [shape: f32[2,33,18], index: 2, kind: output, shape index: {}]
  %s3 = sld [smem:[#allocation0]]
  $region45: #{tpu_custom_call.1} parent=0
    _
  %s5 = ssub.s32 1, %s3
  %s6 = scalar_select 0, %s5, %s3
  loop: start=0, step=1, limit=6
  $region2: #{tpu_custom_call.1} parent=0 // loop_pre_header
    _
  $region3: #{tpu_custom_call.1} parent=0 // loop_header
    %s8 = sphi 0, %s12
    %p9 = scmp.ge.s32.totalorder %s8, 6
    %s15 = sphi 0, %s27
    %s16 = sphi 0, %s23
    %s17 = sphi 0, %s15
    %s18 = sphi 0, %s16
    %s19 = sphi 0, %s17
    %s20 = sphi 0, %s18
    %s38 = sphi 0, %s40
    %s41 = sphi 0, %s38
    %s42 = sphi 0, %s41
    %s58 = sphi 0, %s42
    %s72 = sphi 0, %s74
    %s75 = sphi 0, %s72
    %s76 = sphi 0, %s75
    %s92 = sphi 0, %s76
    %s98 = sphi 0, %s100
    %s101 = sphi 0, %s98
    %s102 = sphi 0, %s101
    %s118 = sphi 0, %s102
  $region4: #{tpu_custom_call.1} parent=0 // loop_header_branch
    %11 = sbr.rel (%p9) target = $region8
  $region5: #{tpu_custom_call.1} parent=0 // loop_body
    %s13 = ssub.s32 %s8, 1
    %s14 = ssub.s32 %s8, 2
    %s21 = sadd.s32 1, %s16
    %p22 = scmp.ge.s32.totalorder %s21, 2
    %s23 = scalar_select %p22, 0, %s21
    %s24 = sadd.s32 1, %s15
    %s25 = scalar_select %p22, %s24, %s15
    %p26 = scmp.ge.s32.totalorder %s25, 2
    %s27 = scalar_select %p26, 0, %s25
    %s28 = smul.u32 %s15, 2
    %s29 = sadd.s32 %s28, %s16
    %p30 = scmp.lt.s32.totalorder %s29, 3
    %s31 = scalar_select %p30, %s29, 3
    %s32 = smul.u32 %s27, 2
    %s33 = sadd.s32 %s32, %s23
    %p34 = scmp.lt.s32.totalorder %s33, 3
    %s35 = scalar_select %p34, %s33, 3
    %s36 = ssub.s32 %s31, %s35
    %p37 = scmp.eq.s32.totalorder %s36, 0
    %s39 = sadd.s32 %s38, 1
    %s40 = scalar_select %p37, %s38, %s39
    %p43 = pneg %p37
    %p44 = scmp.eq.s32.totalorder %s8, 3
    %p45 = por %p43, %p44
    %p46 = scmp.ne.s32.totalorder %s38, %s41
    %p47 = scmp.eq.s32.totalorder %s8, 0
    %p48 = por %p46, %p47
    %p49 = scmp.ne.s32.totalorder %s38, %s41
    %p50 = scmp.eq.s32.totalorder %s13, 3
    %p51 = por %p49, %p50
    %p52 = scmp.ne.s32.totalorder %s41, %s42
    %p53 = scmp.eq.s32.totalorder %s13, 0
    %p54 = por %p52, %p53
    %p55 = scmp.ne.s32.totalorder %s41, %s42
    %p56 = scmp.eq.s32.totalorder %s14, 3
    %p57 = por %p55, %p56
    %p59 = scmp.ne.s32.totalorder %s42, %s58
    %p60 = scmp.eq.s32.totalorder %s14, 0
    %p61 = por %p59, %p60
    %s62 = smul.u32 %s15, 2
    %s63 = sadd.s32 %s62, %s16
    %p64 = scmp.lt.s32.totalorder %s63, 3
    %s65 = scalar_select %p64, %s63, 3
    %s66 = smul.u32 %s27, 2
    %s67 = sadd.s32 %s66, %s23
    %p68 = scmp.lt.s32.totalorder %s67, 3
    %s69 = scalar_select %p68, %s67, 3
    %s70 = ssub.s32 %s65, %s69
    %p71 = scmp.eq.s32.totalorder %s70, 0
    %s73 = sadd.s32 %s72, 1
    %s74 = scalar_select %p71, %s72, %s73
    %p77 = pneg %p71
    %p78 = scmp.eq.s32.totalorder %s8, 3
    %p79 = por %p77, %p78
    %p80 = scmp.ne.s32.totalorder %s72, %s75
    %p81 = scmp.eq.s32.totalorder %s8, 0
    %p82 = por %p80, %p81
    %p83 = scmp.ne.s32.totalorder %s72, %s75
    %p84 = scmp.eq.s32.totalorder %s13, 3
    %p85 = por %p83, %p84
    %p86 = scmp.ne.s32.totalorder %s75, %s76
    %p87 = scmp.eq.s32.totalorder %s13, 0
    %p88 = por %p86, %p87
    %p89 = scmp.ne.s32.totalorder %s75, %s76
    %p90 = scmp.eq.s32.totalorder %s14, 3
    %p91 = por %p89, %p90
    %p93 = scmp.ne.s32.totalorder %s76, %s92
    %p94 = scmp.eq.s32.totalorder %s14, 0
    %p95 = por %p93, %p94
    %s96 = ssub.s32 %s15, %s27
    %p97 = scmp.eq.s32.totalorder %s96, 0
    %s99 = sadd.s32 %s98, 1
    %s100 = scalar_select %p97, %s98, %s99
    %p103 = pneg %p97
    %p104 = scmp.eq.s32.totalorder %s8, 3
    %p105 = por %p103, %p104
    %p106 = scmp.ne.s32.totalorder %s98, %s101
    %p107 = scmp.eq.s32.totalorder %s8, 0
    %p108 = por %p106, %p107
    %p109 = scmp.ne.s32.totalorder %s98, %s101
    %p110 = scmp.eq.s32.totalorder %s13, 3
    %p111 = por %p109, %p110
    %p112 = scmp.ne.s32.totalorder %s101, %s102
    %p113 = scmp.eq.s32.totalorder %s13, 0
    %p114 = por %p112, %p113
    %p115 = scmp.ne.s32.totalorder %s101, %s102
    %p116 = scmp.eq.s32.totalorder %s14, 3
    %p117 = por %p115, %p116
    %p119 = scmp.ne.s32.totalorder %s102, %s118
    %p120 = scmp.eq.s32.totalorder %s14, 0
    %p121 = por %p119, %p120
    %p122 = scmp.le.s32.totalorder 1, %s8
    %p123 = scmp.lt.s32.totalorder %s8, 5
    %p124 = pnand %p122, %p123
    %p125 = pneg %p124
    // Predicated region
    $region9: #{tpu_custom_call.1} parent=5 // pred_check
      _
    $region10: #{tpu_custom_call.1} parent=5 // pred_check_branch
      %127 = sbr.rel (%p124) target = $region12
    $region11: #{tpu_custom_call.1} parent=5 // pred_region
      %s128 = ssub.s32 %s8, 1
    $region12: #{tpu_custom_call.1} parent=5 // pred_fallthru
      _
    %p129 = scmp.lt.s32.totalorder %s8, 4
    // Predicated region
    $region13: #{tpu_custom_call.1} parent=5 // pred_check
      %p130 = pneg %p129
    $region14: #{tpu_custom_call.1} parent=5 // pred_check_branch
      %132 = sbr.rel (%p130) target = $region16
    $region15: #{tpu_custom_call.1} parent=5 // pred_region
      // Predicated region
      $region17: #{tpu_custom_call.1} parent=15 // pred_check
        %p133 = pneg %p48
      $region18: #{tpu_custom_call.1} parent=15 // pred_check_branch
        %135 = sbr.rel (%p133) target = $region20
      $region19: #{tpu_custom_call.1} parent=15 // pred_region
        %s136 = smul.u32 %s15, 2
        %s137 = sadd.s32 %s136, %s16
        %p138 = scmp.lt.s32.totalorder %s137, 3
        %s139 = scalar_select %p138, %s137, 3
        %s140 = smul.u32 8, %s139
        %s141 = ssub.s32 25, %s140
        %p142 = scmp.lt.s32.totalorder %s141, 8
        %s143 = scalar_select %p142, %s141, 8
        %s144 = smul.u32 128, %s143
        %p145 = scmp.lt.s32.totalorder %s140, 24
        %s146 = scalar_select %p145, %s140, 24
        %s147 = smul.addr %s146, 8
        %s148 = scalar_lea.vmem %s0, %s147
        %s149 = smul.u32 %s15, 2
        %s150 = sadd.s32 %s149, %s16
        %p151 = scmp.lt.s32.totalorder %s150, 3
        %s152 = scalar_select %p151, %s150, 3
        %s153 = smul.u32 8, %s152
        %s154 = ssub.s32 25, %s153
        %p155 = scmp.lt.s32.totalorder %s154, 8
        %s156 = scalar_select %p155, %s154, 8
        %s157 = smul.u32 128, %s156
      $region20: #{tpu_custom_call.1} parent=15 // pred_fallthru
        _
      // Predicated region
      $region21: #{tpu_custom_call.1} parent=15 // pred_check
        %p158 = pneg %p82
      $region22: #{tpu_custom_call.1} parent=15 // pred_check_branch
        %160 = sbr.rel (%p158) target = $region24
      $region23: #{tpu_custom_call.1} parent=15 // pred_region
        %s161 = smul.u32 %s15, 2
        %s162 = sadd.s32 %s161, %s16
        %p163 = scmp.lt.s32.totalorder %s162, 3
        %s164 = scalar_select %p163, %s162, 3
        %s165 = smul.u32 8, %s164
        %s166 = ssub.s32 25, %s165
        %p167 = scmp.lt.s32.totalorder %s166, 8
        %s168 = scalar_select %p167, %s166, 8
        %s169 = smul.u32 128, %s168
        %p170 = scmp.lt.s32.totalorder %s165, 24
        %s171 = scalar_select %p170, %s165, 24
        %s172 = smul.addr %s171, 8
        %s173 = scalar_lea.vmem %s1, %s172
        %s174 = smul.u32 %s15, 2
        %s175 = sadd.s32 %s174, %s16
        %p176 = scmp.lt.s32.totalorder %s175, 3
        %s177 = scalar_select %p176, %s175, 3
        %s178 = smul.u32 8, %s177
        %s179 = ssub.s32 25, %s178
        %p180 = scmp.lt.s32.totalorder %s179, 8
        %s181 = scalar_select %p180, %s179, 8
        %s182 = smul.u32 128, %s181
      $region24: #{tpu_custom_call.1} parent=15 // pred_fallthru
        _
    $region16: #{tpu_custom_call.1} parent=5 // pred_fallthru
      _
    %p183 = scmp.le.s32.totalorder 1, %s8
    %p184 = scmp.lt.s32.totalorder %s8, 5
    %p185 = pnand %p183, %p184
    %p186 = pneg %p185
    // Predicated region
    $region25: #{tpu_custom_call.1} parent=5 // pred_check
      _
    $region26: #{tpu_custom_call.1} parent=5 // pred_check_branch
      %188 = sbr.rel (%p185) target = $region28
    $region27: #{tpu_custom_call.1} parent=5 // pred_region
      %s189 = ssub.s32 %s8, 1
      %s190 = smul.u32 %s17, 2
      %s191 = sadd.s32 %s190, %s18
      %p192 = scmp.lt.s32.totalorder %s191, 3
      %s193 = scalar_select %p192, %s191, 3
      %s194 = smul.u32 8, %s193
      %s195 = ssub.s32 25, %s194
      %p196 = scmp.lt.s32.totalorder %s195, 8
      %s197 = scalar_select %p196, %s195, 8
      %s198 = smul.u32 128, %s197
      %p199 = scmp.lt.s32.totalorder %s194, 24
      %s200 = scalar_select %p199, %s194, 24
      %s201 = smul.addr %s200, 8
      %s202 = scalar_lea.vmem %s0, %s201
      %p203 = pneg %p54
      %p204 = pneg %p51
      %s205 = smul.u32 %s17, 2
      %s206 = sadd.s32 %s205, %s18
      %p207 = scmp.lt.s32.totalorder %s206, 3
      %s208 = scalar_select %p207, %s206, 3
      %s209 = smul.u32 8, %s208
      %s210 = ssub.s32 25, %s209
      %p211 = scmp.lt.s32.totalorder %s210, 8
      %s212 = scalar_select %p211, %s210, 8
      %s213 = smul.u32 128, %s212
      %p214 = scmp.lt.s32.totalorder %s209, 24
      %s215 = scalar_select %p214, %s209, 24
      %s216 = smul.addr %s215, 8
      %s217 = scalar_lea.vmem %s1, %s216
      %p218 = pneg %p88
      %p219 = pneg %p85
      %p220 = pneg %p114
      %p221 = pneg %p111
      %p222 = scmp.lt.s32.totalorder %s17, 1
      %s223 = scalar_select %p222, %s17, 1
      %s224 = smul.addr %s223, 5
      %s225 = smul.addr %s224, 8
      %s226 = scalar_lea.vmem %s2, %s225
      %s227 = smul.u32 %s17, 2
      %s228 = sadd.s32 %s227, %s18
      %p229 = scmp.lt.s32.totalorder %s228, 3
      %s230 = scalar_select %p229, %s228, 3
      %s231 = smul.u32 8, %s230
      %s232 = ssub.s32 25, %s231
      %p233 = scmp.lt.s32.totalorder %s232, 8
      %s234 = scalar_select %p233, %s232, 8
      %s235 = smul.u32 128, %s234
      %p236 = scmp.lt.s32.totalorder %s231, 24
      %s237 = scalar_select %p236, %s231, 24
      %s238 = smul.addr %s237, 8
      %s239 = scalar_lea.vmem %s0, %s238
      %s240 = smul.u32 %s17, 2
      %s241 = sadd.s32 %s240, %s18
      %p242 = scmp.lt.s32.totalorder %s241, 3
      %s243 = scalar_select %p242, %s241, 3
      %s244 = smul.u32 8, %s243
      %s245 = ssub.s32 25, %s244
      %p246 = scmp.lt.s32.totalorder %s245, 8
      %s247 = scalar_select %p246, %s245, 8
      %s248 = smul.u32 128, %s247
      %s249 = smul.u32 %s17, 2
      %s250 = sadd.s32 %s249, %s18
      %p251 = scmp.lt.s32.totalorder %s250, 3
      %s252 = scalar_select %p251, %s250, 3
      %s253 = smul.u32 8, %s252
      %s254 = ssub.s32 25, %s253
      %p255 = scmp.lt.s32.totalorder %s254, 8
      %s256 = scalar_select %p255, %s254, 8
      %s257 = smul.u32 128, %s256
      %p258 = scmp.lt.s32.totalorder %s253, 24
      %s259 = scalar_select %p258, %s253, 24
      %s260 = smul.addr %s259, 8
      %s261 = scalar_lea.vmem %s1, %s260
      %s262 = smul.u32 %s17, 2
      %s263 = sadd.s32 %s262, %s18
      %p264 = scmp.lt.s32.totalorder %s263, 3
      %s265 = scalar_select %p264, %s263, 3
      %s266 = smul.u32 8, %s265
      %s267 = ssub.s32 25, %s266
      %p268 = scmp.lt.s32.totalorder %s267, 8
      %s269 = scalar_select %p268, %s267, 8
      %s270 = smul.u32 128, %s269
      %p271 = scmp.lt.s32.totalorder %s17, 1
      %s272 = scalar_select %p271, %s17, 1
      %s273 = smul.addr %s272, 5
      %s274 = smul.addr %s273, 8
      %s275 = scalar_lea.vmem %s2, %s274
      %p276 = scmp.eq.s32.totalorder %s18, 0
      // Predicated region
      $region29: #{tpu_custom_call.1} parent=27 // pred_check
        %p277 = pneg %p276
      $region30: #{tpu_custom_call.1} parent=27 // pred_check_branch
        %279 = sbr.rel (%p277) target = $region32
      $region31: #{tpu_custom_call.1} parent=27 // pred_region
        %vm280 = vcmask 146432
        %281 = vst.msk [vmem:[%s275] sm:$0xff] %vm280, 0.0
        %282 = vst.msk [vmem:[%s275 + $0x8] sm:$0xff] %vm280, 0.0
        %283 = vst.msk [vmem:[%s275 + $0x10] sm:$0xff] %vm280, 0.0
        %284 = vst.msk [vmem:[%s275 + $0x18] sm:$0xff] %vm280, 0.0
        %vm285 = vcmask 139264
        %286 = vst.msk [vmem:[%s275 + $0x20] sm:$0x1] %vm285, 0.0
      $region32: #{tpu_custom_call.1} parent=27 // pred_fallthru
        _
      %v287 = vld [vmem:[%s239] sm:$0xff]
      %v288 = vld [vmem:[%s239 + $0x8] sm:$0xff]
      %v289 = vld [vmem:[%s239 + $0x10] sm:$0xff]
      %v290 = vld [vmem:[%s239 + $0x18] sm:$0xff]
      %v291 = vld [vmem:[%s239 + $0x20] sm:$0xff]
      %v292 = vld [vmem:[%s239 + $0x28] sm:$0xff]
      %v293 = vld [vmem:[%s239 + $0x30] sm:$0xff]
      %v294 = vld [vmem:[%s239 + $0x38] sm:$0xff]
      %v295 = vld [vmem:[%s261] sm:$0xff]
      %v296 = vld [vmem:[%s261 + $0x8] sm:$0xff]
      %v297 = vld [vmem:[%s261 + $0x10] sm:$0xff]
      %v298 = vld [vmem:[%s261 + $0x18] sm:$0xff]
      %v299 = vld [vmem:[%s261 + $0x20] sm:$0xff]
      %v300 = vld [vmem:[%s261 + $0x28] sm:$0xff]
      %v301 = vld [vmem:[%s261 + $0x30] sm:$0xff]
      %v302 = vld [vmem:[%s261 + $0x38] sm:$0xff]
      %s303 = smul.u32 %s17, 2
      %s304 = sadd.s32 %s303, %s18
      %s305 = smul.u32 %s304, 64
      %v306 = vlaneseq
      %v307 = vshrl.u32 %v306, 7
      %v308 = vadd.s32 %v307, 8
      %v309 = vadd.s32 %v307, 16
      %v310 = vadd.s32 %v307, 24
      %v311 = vadd.s32 %v307, 32
      %v312 = vadd.s32 %v307, 40
      %v313 = vadd.s32 %v307, 48
      %v314 = vadd.s32 %v307, 56
      %v315 = vstv %s305
      %v316 = vadd.s32 %v315, %v307
      %v317 = vadd.s32 %v315, %v308
      %v318 = vadd.s32 %v315, %v309
      %v319 = vadd.s32 %v315, %v310
      %v320 = vadd.s32 %v315, %v311
      %v321 = vadd.s32 %v315, %v312
      %v322 = vadd.s32 %v315, %v313
      %v323 = vadd.s32 %v315, %v314
      %vm324 = vcmp.lt.s32.totalorder %v316, 200
      %vm325 = vcmp.lt.s32.totalorder %v317, 200
      %vm326 = vcmp.lt.s32.totalorder %v318, 200
      %vm327 = vcmp.lt.s32.totalorder %v319, 200
      %vm328 = vcmp.lt.s32.totalorder %v320, 200
      %vm329 = vcmp.lt.s32.totalorder %v321, 200
      %vm330 = vcmp.lt.s32.totalorder %v322, 200
      %vm331 = vcmp.lt.s32.totalorder %v323, 200
      %v332 = vsel %vm324, 1, 0
      %v333 = vsel %vm325, 1, 0
      %v334 = vsel %vm326, 1, 0
      %v335 = vsel %vm327, 1, 0
      %v336 = vsel %vm328, 1, 0
      %v337 = vsel %vm329, 1, 0
      %v338 = vsel %vm330, 1, 0
      %v339 = vsel %vm331, 1, 0
      %vm340 = vcmp.eq.s32.totalorder %v332, 1
      %vm341 = vcmp.eq.s32.totalorder %v333, 1
      %vm342 = vcmp.eq.s32.totalorder %v334, 1
      %vm343 = vcmp.eq.s32.totalorder %v335, 1
      %vm344 = vcmp.eq.s32.totalorder %v336, 1
      %vm345 = vcmp.eq.s32.totalorder %v337, 1
      %vm346 = vcmp.eq.s32.totalorder %v338, 1
      %vm347 = vcmp.eq.s32.totalorder %v339, 1
      %v348 = vsel %vm340, %v287, 0.0
      %v349 = vsel %vm341, %v288, 0.0
      %v350 = vsel %vm342, %v289, 0.0
      %v351 = vsel %vm343, %v290, 0.0
      %v352 = vsel %vm344, %v291, 0.0
      %v353 = vsel %vm345, %v292, 0.0
      %v354 = vsel %vm346, %v293, 0.0
      %v355 = vsel %vm347, %v294, 0.0
      %v356 = vmul.f32 %v348, %v348
      %v357 = vmul.f32 %v349, %v349
      %v358 = vmul.f32 %v350, %v350
      %v359 = vmul.f32 %v351, %v351
      %v360 = vmul.f32 %v352, %v352
      %v361 = vmul.f32 %v353, %v353
      %v362 = vmul.f32 %v354, %v354
      %v363 = vmul.f32 %v355, %v355
      %vm364 = vcmask 130048
      %v365 = vsel %vm364, %v356, 0.0
      %366 = vadd.xlane.f32.xlu0 %v365
      %v367 = vpop.xlane.xlu0 %366
      %v368 = vsel %vm364, %v357, 0.0
      %369 = vadd.xlane.f32.xlu0 %v368
      %v370 = vpop.xlane.xlu0 %369
      %v371 = vsel %vm364, %v358, 0.0
      %372 = vadd.xlane.f32.xlu0 %v371
      %v373 = vpop.xlane.xlu0 %372
      %v374 = vsel %vm364, %v359, 0.0
      %375 = vadd.xlane.f32.xlu0 %v374
      %v376 = vpop.xlane.xlu0 %375
      %v377 = vsel %vm364, %v360, 0.0
      %378 = vadd.xlane.f32.xlu0 %v377
      %v379 = vpop.xlane.xlu0 %378
      %v380 = vsel %vm364, %v361, 0.0
      %381 = vadd.xlane.f32.xlu0 %v380
      %v382 = vpop.xlane.xlu0 %381
      %v383 = vsel %vm364, %v362, 0.0
      %384 = vadd.xlane.f32.xlu0 %v383
      %v385 = vpop.xlane.xlu0 %384
      %v386 = vsel %vm364, %v363, 0.0
      %387 = vadd.xlane.f32.xlu0 %v386
      %v388 = vpop.xlane.xlu0 %387
      %vm389 = vcmp.lt.s32.totalorder %v295, 5
      %vm390 = vcmp.lt.s32.totalorder %v296, 5
      %vm391 = vcmp.lt.s32.totalorder %v297, 5
      %vm392 = vcmp.lt.s32.totalorder %v298, 5
      %vm393 = vcmp.lt.s32.totalorder %v299, 5
      %vm394 = vcmp.lt.s32.totalorder %v300, 5
      %vm395 = vcmp.lt.s32.totalorder %v301, 5
      %vm396 = vcmp.lt.s32.totalorder %v302, 5
      %vm397 = vmand %vm389, %vm324
      %vm398 = vmand %vm390, %vm325
      %vm399 = vmand %vm391, %vm326
      %vm400 = vmand %vm392, %vm327
      %vm401 = vmand %vm393, %vm328
      %vm402 = vmand %vm394, %vm329
      %vm403 = vmand %vm395, %vm330
      %vm404 = vmand %vm396, %vm331
      %vm405 = vcmp.ge.s32.totalorder %v295, 5
      %vm406 = vcmp.ge.s32.totalorder %v296, 5
      %vm407 = vcmp.ge.s32.totalorder %v297, 5
      %vm408 = vcmp.ge.s32.totalorder %v298, 5
      %vm409 = vcmp.ge.s32.totalorder %v299, 5
      %vm410 = vcmp.ge.s32.totalorder %v300, 5
      %vm411 = vcmp.ge.s32.totalorder %v301, 5
      %vm412 = vcmp.ge.s32.totalorder %v302, 5
      %vm413 = vmand %vm405, %vm324
      %vm414 = vmand %vm406, %vm325
      %vm415 = vmand %vm407, %vm326
      %vm416 = vmand %vm408, %vm327
      %vm417 = vmand %vm409, %vm328
      %vm418 = vmand %vm410, %vm329
      %vm419 = vmand %vm411, %vm330
      %vm420 = vmand %vm412, %vm331
      %v421 = vmul.u32 %v295, 4
      %v422 = vmul.u32 %v296, 4
      %v423 = vmul.u32 %v297, 4
      %v424 = vmul.u32 %v298, 4
      %v425 = vmul.u32 %v299, 4
      %v426 = vmul.u32 %v300, 4
      %v427 = vmul.u32 %v301, 4
      %v428 = vmul.u32 %v302, 4
      %429 = vrot.lane.b32.xlu0 %v295, 127
      %v430 = vpop.permute.xlu0 %429
      %431 = vrot.lane.b32.xlu0 %v296, 127
      %v432 = vpop.permute.xlu0 %431
      %433 = vrot.lane.b32.xlu0 %v297, 127
      %v434 = vpop.permute.xlu0 %433
      %435 = vrot.lane.b32.xlu0 %v298, 127
      %v436 = vpop.permute.xlu0 %435
      %437 = vrot.lane.b32.xlu0 %v299, 127
      %v438 = vpop.permute.xlu0 %437
      %439 = vrot.lane.b32.xlu0 %v300, 127
      %v440 = vpop.permute.xlu0 %439
      %441 = vrot.lane.b32.xlu0 %v301, 127
      %v442 = vpop.permute.xlu0 %441
      %443 = vrot.lane.b32.xlu0 %v302, 127
      %v444 = vpop.permute.xlu0 %443
      %v445 = vadd.s32 %v421, %v430
      %v446 = vadd.s32 %v422, %v432
      %v447 = vadd.s32 %v423, %v434
      %v448 = vadd.s32 %v424, %v436
      %v449 = vadd.s32 %v425, %v438
      %v450 = vadd.s32 %v426, %v440
      %v451 = vadd.s32 %v427, %v442
      %v452 = vadd.s32 %v428, %v444
      %v453 = vlaneseq
      %v454 = vand.u32 %v453, 127
      %455 = vset.pattern.permute.xlu0 0
      %456 = vperm.xlu0 %455, %v445
      %v457 = vpop.permute.xlu0 %456
      %458 = vset.pattern.permute.xlu0 0
      %459 = vperm.xlu0 %458, %v446
      %v460 = vpop.permute.xlu0 %459
      %461 = vset.pattern.permute.xlu0 0
      %462 = vperm.xlu0 %461, %v447
      %v463 = vpop.permute.xlu0 %462
      %464 = vset.pattern.permute.xlu0 0
      %465 = vperm.xlu0 %464, %v448
      %v466 = vpop.permute.xlu0 %465
      %467 = vset.pattern.permute.xlu0 0
      %468 = vperm.xlu0 %467, %v449
      %v469 = vpop.permute.xlu0 %468
      %470 = vset.pattern.permute.xlu0 0
      %471 = vperm.xlu0 %470, %v450
      %v472 = vpop.permute.xlu0 %471
      %473 = vset.pattern.permute.xlu0 0
      %474 = vperm.xlu0 %473, %v451
      %v475 = vpop.permute.xlu0 %474
      %476 = vset.pattern.permute.xlu0 0
      %477 = vperm.xlu0 %476, %v452
      %v478 = vpop.permute.xlu0 %477
      %vm479 = vcmp.eq.s32.totalorder %v454, %v457
      %vm480 = vcmp.eq.s32.totalorder %v454, %v460
      %vm481 = vcmp.eq.s32.totalorder %v454, %v463
      %vm482 = vcmp.eq.s32.totalorder %v454, %v466
      %vm483 = vcmp.eq.s32.totalorder %v454, %v469
      %vm484 = vcmp.eq.s32.totalorder %v454, %v472
      %vm485 = vcmp.eq.s32.totalorder %v454, %v475
      %vm486 = vcmp.eq.s32.totalorder %v454, %v478
      %v487 = vsel %vm397, 1, 0
      %v488 = vsel %vm398, 1, 0
      %v489 = vsel %vm399, 1, 0
      %v490 = vsel %vm400, 1, 0
      %v491 = vsel %vm401, 1, 0
      %v492 = vsel %vm402, 1, 0
      %v493 = vsel %vm403, 1, 0
      %v494 = vsel %vm404, 1, 0
      %495 = vset.pattern.permute.xlu0 0
      %496 = vperm.xlu0 %495, %v487
      %v497 = vpop.permute.xlu0 %496
      %498 = vset.pattern.permute.xlu0 0
      %499 = vperm.xlu0 %498, %v488
      %v500 = vpop.permute.xlu0 %499
      %501 = vset.pattern.permute.xlu0 0
      %502 = vperm.xlu0 %501, %v489
      %v503 = vpop.permute.xlu0 %502
      %504 = vset.pattern.permute.xlu0 0
      %505 = vperm.xlu0 %504, %v490
      %v506 = vpop.permute.xlu0 %505
      %507 = vset.pattern.permute.xlu0 0
      %508 = vperm.xlu0 %507, %v491
      %v509 = vpop.permute.xlu0 %508
      %510 = vset.pattern.permute.xlu0 0
      %511 = vperm.xlu0 %510, %v492
      %v512 = vpop.permute.xlu0 %511
      %513 = vset.pattern.permute.xlu0 0
      %514 = vperm.xlu0 %513, %v493
      %v515 = vpop.permute.xlu0 %514
      %516 = vset.pattern.permute.xlu0 0
      %517 = vperm.xlu0 %516, %v494
      %v518 = vpop.permute.xlu0 %517
      %vm519 = vcmp.eq.s32.totalorder %v497, 1
      %vm520 = vcmp.eq.s32.totalorder %v500, 1
      %vm521 = vcmp.eq.s32.totalorder %v503, 1
      %vm522 = vcmp.eq.s32.totalorder %v506, 1
      %vm523 = vcmp.eq.s32.totalorder %v509, 1
      %vm524 = vcmp.eq.s32.totalorder %v512, 1
      %vm525 = vcmp.eq.s32.totalorder %v515, 1
      %vm526 = vcmp.eq.s32.totalorder %v518, 1
      %vm527 = vmand %vm479, %vm519
      %vm528 = vmand %vm480, %vm520
      %vm529 = vmand %vm481, %vm521
      %vm530 = vmand %vm482, %vm522
      %vm531 = vmand %vm483, %vm523
      %vm532 = vmand %vm484, %vm524
      %vm533 = vmand %vm485, %vm525
      %vm534 = vmand %vm486, %vm526
      %v535 = vsel %vm527, 1.0, 0.0
      %v536 = vsel %vm528, 1.0, 0.0
      %v537 = vsel %vm529, 1.0, 0.0
      %v538 = vsel %vm530, 1.0, 0.0
      %v539 = vsel %vm531, 1.0, 0.0
      %v540 = vsel %vm532, 1.0, 0.0
      %v541 = vsel %vm533, 1.0, 0.0
      %v542 = vsel %vm534, 1.0, 0.0
      %vm543 = vcmp.eq.s32.totalorder %v454, 32
      %v544 = vsel %vm413, 1, 0
      %v545 = vsel %vm414, 1, 0
      %v546 = vsel %vm415, 1, 0
      %v547 = vsel %vm416, 1, 0
      %v548 = vsel %vm417, 1, 0
      %v549 = vsel %vm418, 1, 0
      %v550 = vsel %vm419, 1, 0
      %v551 = vsel %vm420, 1, 0
      %552 = vset.pattern.permute.xlu0 0
      %553 = vperm.xlu0 %552, %v544
      %v554 = vpop.permute.xlu0 %553
      %555 = vset.pattern.permute.xlu0 0
      %556 = vperm.xlu0 %555, %v545
      %v557 = vpop.permute.xlu0 %556
      %558 = vset.pattern.permute.xlu0 0
      %559 = vperm.xlu0 %558, %v546
      %v560 = vpop.permute.xlu0 %559
      %561 = vset.pattern.permute.xlu0 0
      %562 = vperm.xlu0 %561, %v547
      %v563 = vpop.permute.xlu0 %562
      %564 = vset.pattern.permute.xlu0 0
      %565 = vperm.xlu0 %564, %v548
      %v566 = vpop.permute.xlu0 %565
      %567 = vset.pattern.permute.xlu0 0
      %568 = vperm.xlu0 %567, %v549
      %v569 = vpop.permute.xlu0 %568
      %570 = vset.pattern.permute.xlu0 0
      %571 = vperm.xlu0 %570, %v550
      %v572 = vpop.permute.xlu0 %571
      %573 = vset.pattern.permute.xlu0 0
      %574 = vperm.xlu0 %573, %v551
      %v575 = vpop.permute.xlu0 %574
      %vm576 = vcmp.eq.s32.totalorder %v554, 1
      %vm577 = vcmp.eq.s32.totalorder %v557, 1
      %vm578 = vcmp.eq.s32.totalorder %v560, 1
      %vm579 = vcmp.eq.s32.totalorder %v563, 1
      %vm580 = vcmp.eq.s32.totalorder %v566, 1
      %vm581 = vcmp.eq.s32.totalorder %v569, 1
      %vm582 = vcmp.eq.s32.totalorder %v572, 1
      %vm583 = vcmp.eq.s32.totalorder %v575, 1
      %vm584 = vmand %vm543, %vm576
      %vm585 = vmand %vm543, %vm577
      %vm586 = vmand %vm543, %vm578
      %vm587 = vmand %vm543, %vm579
      %vm588 = vmand %vm543, %vm580
      %vm589 = vmand %vm543, %vm581
      %vm590 = vmand %vm543, %vm582
      %vm591 = vmand %vm543, %vm583
      %v592 = vsel %vm584, 1.0, %v535
      %v593 = vsel %vm585, 1.0, %v536
      %v594 = vsel %vm586, 1.0, %v537
      %v595 = vsel %vm587, 1.0, %v538
      %v596 = vsel %vm588, 1.0, %v539
      %v597 = vsel %vm589, 1.0, %v540
      %v598 = vsel %vm590, 1.0, %v541
      %v599 = vsel %vm591, 1.0, %v542
      %v600 = vsel %vm364, %v348, 1.0
      %v601 = vsel %vm364, %v349, 1.0
      %v602 = vsel %vm364, %v350, 1.0
      %v603 = vsel %vm364, %v351, 1.0
      %v604 = vsel %vm364, %v352, 1.0
      %v605 = vsel %vm364, %v353, 1.0
      %v606 = vsel %vm364, %v354, 1.0
      %v607 = vsel %vm364, %v355, 1.0
      %vm608 = vcmask 138240
      %v609 = vsel %vm608, %v600, %v367
      %v610 = vsel %vm608, %v601, %v370
      %v611 = vsel %vm608, %v602, %v373
      %v612 = vsel %vm608, %v603, %v376
      %v613 = vsel %vm608, %v604, %v379
      %v614 = vsel %vm608, %v605, %v382
      %v615 = vsel %vm608, %v606, %v385
      %v616 = vsel %vm608, %v607, %v388
      %v617 = vld [vmem:[%s275] sm:$0xff]
      %v618 = vld [vmem:[%s275 + $0x8] sm:$0xff]
      %v619 = vld [vmem:[%s275 + $0x10] sm:$0xff]
      %v620 = vld [vmem:[%s275 + $0x18] sm:$0xff]
      %v621 = vld [vmem:[%s275 + $0x20] sm:$0x1]
      %622 = vxpose.xlu0.b32.start [1/16] %v592, 128
      %623 = vxpose.xlu0.b32.cont [2/16] %v593, 128
      %624 = vxpose.xlu0.b32.cont [3/16] %v594, 128
      %625 = vxpose.xlu0.b32.cont [4/16] %v595, 128
      %626 = vxpose.xlu0.b32.cont [5/16] %v596, 128
      %627 = vxpose.xlu0.b32.cont [6/16] %v597, 128
      %628 = vxpose.xlu0.b32.cont [7/16] %v598, 128
      %629 = vxpose.xlu0.b32.cont [8/16] %v599, 128
      %630 = vxpose.xlu0.b32.cont [9/16] 0.0, 128
      %631 = vxpose.xlu0.b32.cont [10/16] 0.0, 128
      %632 = vxpose.xlu0.b32.cont [11/16] 0.0, 128
      %633 = vxpose.xlu0.b32.cont [12/16] 0.0, 128
      %634 = vxpose.xlu0.b32.cont [13/16] 0.0, 128
      %635 = vxpose.xlu0.b32.cont [14/16] 0.0, 128
      %636 = vxpose.xlu0.b32.cont [15/16] 0.0, 128
      %637 = vxpose.xlu0.b32.end [16/16] 0.0, 128
      %v638 = vpop.trf.xlu0
      %v639 = vpop.trf.xlu0
      %v640 = vpop.trf.xlu0
      %v641 = vpop.trf.xlu0
      %v642 = vpop.trf.xlu0
      %v643 = vpop.trf.xlu0
      %v644 = vpop.trf.xlu0
      %v645 = vpop.trf.xlu0
      %v646 = vpop.trf.xlu0
      %v647 = vpop.trf.xlu0
      %v648 = vpop.trf.xlu0
      %v649 = vpop.trf.xlu0
      %v650 = vpop.trf.xlu0
      %v651 = vpop.trf.xlu0
      %v652 = vpop.trf.xlu0
      %v653 = vpop.trf.xlu0
      %vm654 = vcmask 523264
      %v656 = vsel %vm654, %v638, 0
      %v659 = vsel %vm654, %v639, 0
      %v662 = vsel %vm654, %v640, 0
      %v665 = vsel %vm654, %v641, 0
      %v668 = vsel %vm654, %v642, 0
      %670 = vmatprep.subr.mxu0 0.0
      %671 = vmatpush1.msra.mxu0 %v609
      %672 = vmatprep.subr.mxu0 0.0
      %673 = vmatpush1.msra.mxu0 %v610
      %674 = vmatprep.subr.mxu0 0.0
      %675 = vmatpush1.msra.mxu0 %v611
      %676 = vmatprep.subr.mxu0 0.0
      %677 = vmatpush1.msra.mxu0 %v612
      %678 = vmatprep.subr.mxu0 0.0
      %679 = vmatpush1.msra.mxu0 %v613
      %680 = vmatprep.subr.mxu0 0.0
      %681 = vmatpush1.msra.mxu0 %v614
      %682 = vmatprep.subr.mxu0 0.0
      %683 = vmatpush1.msra.mxu0 %v615
      %684 = vmatprep.subr.mxu0 0.0
      %685 = vmatpush1.msra.mxu0 %v616
      %686 = vmatprep.subr.mxu0 0.0
      %687 = vmatpush1.msra.mxu0 0.0
      %688 = vmatprep.subr.mxu0 0.0
      %689 = vmatpush1.msra.mxu0 0.0
      %690 = vmatprep.subr.mxu0 0.0
      %691 = vmatpush1.msra.mxu0 0.0
      %692 = vmatprep.subr.mxu0 0.0
      %693 = vmatpush1.msra.mxu0 0.0
      %694 = vmatprep.subr.mxu0 0.0
      %695 = vmatpush1.msra.mxu0 0.0
      %696 = vmatprep.subr.mxu0 0.0
      %697 = vmatpush1.msra.mxu0 0.0
      %698 = vmatprep.subr.mxu0 0.0
      %699 = vmatpush1.msra.mxu0 0.0
      %700 = vmatprep.subr.mxu0 0.0
      %701 = vmatpush1.msra.mxu0 0.0
      %702 = vmatprep.subr.mxu0 0.0
      %703 = vmatpush1.msra.mxu0 0.0
      %704 = vmatprep.subr.mxu0 0.0
      %705 = vmatpush1.msra.mxu0 0.0
      %706 = vmatprep.subr.mxu0 0.0
      %707 = vmatpush1.msra.mxu0 0.0
      %708 = vmatprep.subr.mxu0 0.0
      %709 = vmatpush1.msra.mxu0 0.0
      %710 = vmatprep.subr.mxu0 0.0
      %711 = vmatpush1.msra.mxu0 0.0
      %712 = vmatprep.subr.mxu0 0.0
      %713 = vmatpush1.msra.mxu0 0.0
      %714 = vmatprep.subr.mxu0 0.0
      %715 = vmatpush1.msra.mxu0 0.0
      %716 = vmatprep.subr.mxu0 0.0
      %717 = vmatpush1.msra.mxu0 0.0
      %718 = vmatprep.subr.mxu0 0.0
      %719 = vmatpush1.msra.mxu0 0.0
      %720 = vmatprep.subr.mxu0 0.0
      %721 = vmatpush1.msra.mxu0 0.0
      %722 = vmatprep.subr.mxu0 0.0
      %723 = vmatpush1.msra.mxu0 0.0
      %724 = vmatprep.subr.mxu0 0.0
      %725 = vmatpush1.msra.mxu0 0.0
      %726 = vmatprep.subr.mxu0 0.0
      %727 = vmatpush1.msra.mxu0 0.0
      %728 = vmatprep.subr.mxu0 0.0
      %729 = vmatpush1.msra.mxu0 0.0
      %730 = vmatprep.subr.mxu0 0.0
      %731 = vmatpush1.msra.mxu0 0.0
      %732 = vmatprep.subr.mxu0 0.0
      %733 = vmatpush1.msra.mxu0 0.0
      %734 = vmatprep.mubr.f32.mxu0 0.0
      %735 = vmatmul.mubr.f32.gmra.mrb[0].mxu0 %v656
      %v736 = vpop.f32.mrb[0].mxu0
      %v737 = vadd.f32 0.0, %v736
      %v738 = vpop.f32.mrb[0].mxu0
      %739 = vmatprep.mubr.f32.mxu0 0.0
      %740 = vmatmul.mubr.f32.gmra.mrb[0].mxu0 %v659
      %v741 = vpop.f32.mrb[0].mxu0
      %v742 = vadd.f32 0.0, %v741
      %v743 = vpop.f32.mrb[0].mxu0
      %744 = vmatprep.mubr.f32.mxu0 0.0
      %745 = vmatmul.mubr.f32.gmra.mrb[0].mxu0 %v662
      %v746 = vpop.f32.mrb[0].mxu0
      %v747 = vadd.f32 0.0, %v746
      %v748 = vpop.f32.mrb[0].mxu0
      %749 = vmatprep.mubr.f32.mxu0 0.0
      %750 = vmatmul.mubr.f32.gmra.mrb[0].mxu0 %v665
      %v751 = vpop.f32.mrb[0].mxu0
      %v752 = vadd.f32 0.0, %v751
      %v753 = vpop.f32.mrb[0].mxu0
      %754 = vmatprep.mubr.f32.mxu0 0.0
      %755 = vmatmul.mubr.f32.gmra.mrb[0].mxu0 %v668
      %v756 = vpop.f32.mrb[0].mxu0
      %v757 = vadd.f32 0.0, %v756
      %v758 = vpop.f32.mrb[0].mxu0
      %759 = vdwg.mxu0
      %v760 = vadd.f32 %v617, %v737
      %v761 = vadd.f32 %v618, %v742
      %v762 = vadd.f32 %v619, %v747
      %v763 = vadd.f32 %v620, %v752
      %v764 = vadd.f32 %v621, %v757
      %vm765 = vcmask 146432
      %766 = vst.msk [vmem:[%s275] sm:$0xff] %vm765, %v760
      %767 = vst.msk [vmem:[%s275 + $0x8] sm:$0xff] %vm765, %v761
      %768 = vst.msk [vmem:[%s275 + $0x10] sm:$0xff] %vm765, %v762
      %769 = vst.msk [vmem:[%s275 + $0x18] sm:$0xff] %vm765, %v763
      %vm770 = vcmask 139264
      %771 = vst.msk [vmem:[%s275 + $0x20] sm:$0x1] %vm770, %v764
      %p772 = scmp.lt.s32.totalorder %s17, 1
      %s773 = scalar_select %p772, %s17, 1
      %s774 = smul.addr %s773, 5
      %s775 = smul.addr %s774, 8
      %s776 = scalar_lea.vmem %s2, %s775
      // Predicated region
      $region33: #{tpu_custom_call.1} parent=27 // pred_check
        %p777 = pneg %p111
      $region34: #{tpu_custom_call.1} parent=27 // pred_check_branch
        %779 = sbr.rel (%p777) target = $region36
      $region35: #{tpu_custom_call.1} parent=27 // pred_region
        _
      $region36: #{tpu_custom_call.1} parent=27 // pred_fallthru
        _
    $region28: #{tpu_custom_call.1} parent=5 // pred_fallthru
      _
    %p780 = scmp.le.s32.totalorder 2, %s8
    // Predicated region
    $region37: #{tpu_custom_call.1} parent=5 // pred_check
      %p781 = pneg %p780
    $region38: #{tpu_custom_call.1} parent=5 // pred_check_branch
      %783 = sbr.rel (%p781) target = $region40
    $region39: #{tpu_custom_call.1} parent=5 // pred_region
      %s784 = ssub.s32 %s8, 2
      // Predicated region
      $region41: #{tpu_custom_call.1} parent=39 // pred_check
        %p785 = pneg %p117
      $region42: #{tpu_custom_call.1} parent=39 // pred_check_branch
        %787 = sbr.rel (%p785) target = $region44
      $region43: #{tpu_custom_call.1} parent=39 // pred_region
        %p788 = scmp.lt.s32.totalorder %s19, 1
        %s789 = scalar_select %p788, %s19, 1
        %s790 = smul.addr %s789, 5
        %s791 = smul.addr %s790, 8
        %s792 = scalar_lea.vmem %s2, %s791
      $region44: #{tpu_custom_call.1} parent=39 // pred_fallthru
        _
    $region40: #{tpu_custom_call.1} parent=5 // pred_fallthru
      _
  $region6: #{tpu_custom_call.1} parent=0 // loop_footer
    %s12 = sadd.s32 1, %s8
  $region7: #{tpu_custom_call.1} parent=0 // loop_footer_branch
    %7 = sbr.rel target = $region3
  $region8: #{tpu_custom_call.1} parent=0 // loop_exit
    _

</llo_original>
